<compile_context>
chip_gen: v6e
topology: v6e:2x2x1
jax: 0.10.0
libtpu: 0.0.40
codegen_flags: <defaults>
</compile_context>

<pallas_src>
import functools
import math

import numpy as np

import jax
import jax.numpy as jnp
from jax import lax
from jax.experimental import pallas as pl
from jax.experimental.pallas import tpu as pltpu


def _self_attention_kernel(x_ref, w_ref, b_ref, o_ref, *, dout):
    # x_ref : (Bblk, S, Din)  f32 activation slab for this grid step
    # w_ref : (Din, 3*Dout)   bf16 fused [q|k|v] weights; q block pre-scaled
    # b_ref : (1, 3*Dout)     f32 fused biases; q bias pre-scaled
    # o_ref : (Bblk, S, Dout)
    bb, S, din = x_ref.shape

    # --- Fused QKV projection -------------------------------------------
    # Flatten batch rows into M (= Bblk*S) so this is ONE bf16 matmul with
    # N = 3*Dout, f32 accumulation (MXU-friendly on v5e/v6e/v7x).
    x = x_ref[...].astype(jnp.bfloat16).reshape(bb * S, din)
    qkv = jnp.dot(x, w_ref[...], preferred_element_type=jnp.float32)
    qkv = qkv + b_ref[...]                                   # f32 bias add
    # Precision choice: hold q/k/v in bf16 from here on (cuts ~half the live
    # vreg state, removes per-matmul re-cast passes).
    qkv = qkv.astype(jnp.bfloat16).reshape(bb, S, 3 * dout)

    # Lane-aligned (multiple-of-128) column slices — no data movement.
    q = qkv[:, :, :dout]            # already scaled by 1/sqrt(Dout) via W_q
    k = qkv[:, :, dout:2 * dout]
    v = qkv[:, :, 2 * dout:]

    # --- Attention --------------------------------------------------------
    # Scores: batched q @ k^T, contracting the feature dims directly so k is
    # consumed as a transposed RHS (no materialized k^T in VMEM).
    s = lax.dot_general(q, k, (((2,), (2,)), ((0,), (0,))),
                        preferred_element_type=jnp.float32)  # (Bblk, S, S) f32

    # Numerically stable softmax along keys; f32 math, reciprocal on the EUP.
    m = jnp.max(s, axis=-1, keepdims=True)
    e = jnp.exp(s - m)
    p = e * pl.reciprocal(jnp.sum(e, axis=-1, keepdims=True), approx=True)

    # PV: bf16 operands, f32 accumulation.
    out = lax.dot_general(p.astype(jnp.bfloat16), v,
                          (((2,), (1,)), ((0,), (0,))),
                          preferred_element_type=jnp.float32)  # (Bblk, S, Dout)
    o_ref[...] = out.astype(o_ref.dtype)


def prepare_self_attention_params(wq, wk, wv, bq, bk, bv):
    """One-time parameter prep (keep OUT of the per-call path).

    - transpose Linear weights to (Din, Dout),
    - fold 1/sqrt(Dout) into W_q and b_q,
    - concatenate into a fused (Din, 3*Dout) bf16 weight and (1, 3*Dout) f32 bias.
    """
    dout = wq.shape[0]
    scale = 1.0 / math.sqrt(dout)
    w_fused = jnp.concatenate([wq.T * scale, wk.T, wv.T], axis=1).astype(jnp.bfloat16)
    b_fused = jnp.concatenate([bq * scale, bk, bv]).reshape(1, 3 * dout).astype(jnp.float32)
    return w_fused, b_fused


def self_attention_forward(x, w_fused, b_fused, *, batch_block=None):
    """x: (B, S, Din) -> (B, S, Dout).  w_fused/b_fused from prepare_self_attention_params."""
    B, S, din = x.shape
    dout = w_fused.shape[1] // 3

    if batch_block is None:
        # Largest divisor of B up to 8: batches per grid step (amortizes the
        # per-step overhead and makes M = Bblk*S for the projection matmul).
        batch_block = 1
        for bb in range(1, min(B, 8) + 1):
            if B % bb == 0:
                batch_block = bb
    assert B % batch_block == 0
    grid = (B // batch_block,)

    kernel = functools.partial(_self_attention_kernel, dout=dout)

    # TODO(synk): for S >> 128, switch to a key-tiled online-softmax (flash)
    # structure instead of materializing the full (S, S) score slab in VMEM.
    return pl.pallas_call(
        kernel,
        out_shape=jax.ShapeDtypeStruct((B, S, dout), x.dtype),
        grid_spec=pltpu.PrefetchScalarGridSpec(
            num_scalar_prefetch=0,
            grid=grid,
            in_specs=[
                pl.BlockSpec((batch_block, S, din), lambda i: (i, 0, 0)),
                pl.BlockSpec((din, 3 * dout), lambda i: (0, 0)),   # DMA'd once
                pl.BlockSpec((1, 3 * dout), lambda i: (0, 0)),     # DMA'd once
            ],
            out_specs=pl.BlockSpec((batch_block, S, dout), lambda i: (i, 0, 0)),
        ),
        compiler_params=pltpu.CompilerParams(
            dimension_semantics=("parallel",),
        ),
    )(x, w_fused, b_fused)


def ref_forward(x, wq, wk, wv, bq, bk, bv):
    """Pure-JAX f32 reference matching the PyTorch module exactly."""
    q = x @ wq.T + bq
    k = x @ wk.T + bk
    v = x @ wv.T + bv
    s = jnp.einsum("bqd,bkd->bqk", q, k) / math.sqrt(wq.shape[0])
    p = jax.nn.softmax(s, axis=-1)
    return jnp.einsum("bqk,bkd->bqd", p, v)


if __name__ == "__main__":
    # Small shapes consistent with the module defaults (in_size=out_size=128).
    in_size, out_size = 128, 128
    B, S = 2, 128

    key = jax.random.PRNGKey(0)
    kx, kwq, kwk, kwv, kbq, kbk, kbv = jax.random.split(key, 7)
    x = jax.random.normal(kx, (B, S, in_size), dtype=jnp.float32)

    # Deterministic nn.Linear-style params: U(-1/sqrt(in), 1/sqrt(in)).
    bound = 1.0 / math.sqrt(in_size)
    wq = jax.random.uniform(kwq, (out_size, in_size), jnp.float32, -bound, bound)
    wk = jax.random.uniform(kwk, (out_size, in_size), jnp.float32, -bound, bound)
    wv = jax.random.uniform(kwv, (out_size, in_size), jnp.float32, -bound, bound)
    bq = jax.random.uniform(kbq, (out_size,), jnp.float32, -bound, bound)
    bk = jax.random.uniform(kbk, (out_size,), jnp.float32, -bound, bound)
    bv = jax.random.uniform(kbv, (out_size,), jnp.float32, -bound, bound)

    # One-time parameter prep (transposes/concat/scale-fold out of per-call path).
    w_fused, b_fused = prepare_self_attention_params(wq, wk, wv, bq, bk, bv)

    out = self_attention_forward(x, w_fused, b_fused)
    out = jax.block_until_ready(out)

    ref = ref_forward(x, wq, wk, wv, bq, bk, bv)
    np.testing.assert_allclose(np.asarray(out), np.asarray(ref), rtol=2e-2, atol=2e-2)
    assert out.shape == (B, S, out_size)
    print("KERNEL_OK")
</pallas_src>

<mosaic_0001>
module attributes {stable_mosaic.version = 11 : i64} {
  func.func @_self_attention_kernel(%arg0: i32, %arg1: memref<2x128x128xf32, #tpu.memory_space<vmem>>, %arg2: memref<128x384xbf16, #tpu.memory_space<vmem>>, %arg3: memref<1x384xf32, #tpu.memory_space<vmem>>, %arg4: memref<2x128x128xf32, #tpu.memory_space<vmem>>) attributes {dimension_semantics = [#tpu.dimension_semantics<parallel>], iteration_bounds = array<i64: 1>, scalar_prefetch = 0 : i64, scratch_operands = 0 : i64, tpu.core_type = #tpu.core_type<tc>, window_params = [{transform_indices = @transform_0, window_bounds = array<i64: 2, 128, 128>}, {pipeline_mode = #tpu.pipeline_mode<synchronous>, transform_indices = @transform_1, window_bounds = array<i64: 128, 384>}, {pipeline_mode = #tpu.pipeline_mode<synchronous>, transform_indices = @transform_2, window_bounds = array<i64: 1, 384>}, {transform_indices = @transform_3, window_bounds = array<i64: 2, 128, 128>}]} {
    %c0 = arith.constant 0 : index
    %c0_0 = arith.constant 0 : index
    %c0_1 = arith.constant 0 : index
    %0 = vector.load %arg1[%c0, %c0_0, %c0_1] : memref<2x128x128xf32, #tpu.memory_space<vmem>>, vector<2x128x128xf32>
    %1 = arith.truncf %0 : vector<2x128x128xf32> to vector<2x128x128xbf16>
    %2 = vector.shape_cast %1 : vector<2x128x128xbf16> to vector<256x128xbf16>
    %c0_2 = arith.constant 0 : index
    %c0_3 = arith.constant 0 : index
    %3 = vector.load %arg2[%c0_2, %c0_3] : memref<128x384xbf16, #tpu.memory_space<vmem>>, vector<128x384xbf16>
    %cst = arith.constant dense<0.000000e+00> : vector<256x384xf32>
    %4 = tpu.matmul %2, %3, %cst {dimension_numbers = #tpu.dot_dimension_numbers<[1], [0], [0], [1], [0, 0, 1, 1], [], []>} : vector<256x128xbf16>, vector<128x384xbf16>, vector<256x384xf32> -> vector<256x384xf32>
    %c0_4 = arith.constant 0 : index
    %c0_5 = arith.constant 0 : index
    %5 = vector.load %arg3[%c0_4, %c0_5] : memref<1x384xf32, #tpu.memory_space<vmem>>, vector<1x384xf32>
    %6 = vector.broadcast %5 : vector<1x384xf32> to vector<256x384xf32>
    %7 = arith.addf %4, %6 : vector<256x384xf32>
    %8 = arith.truncf %7 : vector<256x384xf32> to vector<256x384xbf16>
    %9 = vector.shape_cast %8 : vector<256x384xbf16> to vector<2x128x384xbf16>
    %10 = vector.extract_strided_slice %9 {offsets = [0, 0, 0], sizes = [2, 128, 128], strides = [1, 1, 1]} : vector<2x128x384xbf16> to vector<2x128x128xbf16>
    %11 = vector.extract_strided_slice %9 {offsets = [0, 0, 128], sizes = [2, 128, 128], strides = [1, 1, 1]} : vector<2x128x384xbf16> to vector<2x128x128xbf16>
    %12 = vector.extract_strided_slice %9 {offsets = [0, 0, 256], sizes = [2, 128, 128], strides = [1, 1, 1]} : vector<2x128x384xbf16> to vector<2x128x128xbf16>
    %cst_6 = arith.constant dense<0.000000e+00> : vector<2x128x128xf32>
    %13 = tpu.matmul %10, %11, %cst_6 {dimension_numbers = #tpu.dot_dimension_numbers<[2], [2], [1], [1], [0, 0, 0, 1, 1, 1], [0], [0]>} : vector<2x128x128xbf16>, vector<2x128x128xbf16>, vector<2x128x128xf32> -> vector<2x128x128xf32>
    %cst_7 = arith.constant dense<0xFF800000> : vector<2x128xf32>
    %14 = vector.multi_reduction <maximumf>, %13, %cst_7 [2] : vector<2x128x128xf32> to vector<2x128xf32>
    %15 = vector.shape_cast %14 : vector<2x128xf32> to vector<2x128x1xf32>
    %16 = vector.broadcast %15 : vector<2x128x1xf32> to vector<2x128x128xf32>
    %17 = arith.subf %13, %16 : vector<2x128x128xf32>
    %18 = math.exp %17 : vector<2x128x128xf32>
    %cst_8 = arith.constant dense<0.000000e+00> : vector<2x128xf32>
    %19 = vector.multi_reduction <add>, %18, %cst_8 [2] : vector<2x128x128xf32> to vector<2x128xf32>
    %20 = vector.shape_cast %19 : vector<2x128xf32> to vector<2x128x1xf32>
    %21 = tpu.reciprocal %20 {approx = true} : vector<2x128x1xf32> -> vector<2x128x1xf32>
    %22 = vector.broadcast %21 : vector<2x128x1xf32> to vector<2x128x128xf32>
    %23 = arith.mulf %18, %22 : vector<2x128x128xf32>
    %24 = arith.truncf %23 : vector<2x128x128xf32> to vector<2x128x128xbf16>
    %cst_9 = arith.constant dense<0.000000e+00> : vector<2x128x128xf32>
    %25 = tpu.matmul %24, %12, %cst_9 {dimension_numbers = #tpu.dot_dimension_numbers<[2], [1], [1], [2], [0, 0, 0, 1, 1, 2], [0], [0]>} : vector<2x128x128xbf16>, vector<2x128x128xbf16>, vector<2x128x128xf32> -> vector<2x128x128xf32>
    %c0_10 = arith.constant 0 : index
    %c0_11 = arith.constant 0 : index
    %c0_12 = arith.constant 0 : index
    %26 = vector.load %arg4[%c0_10, %c0_11, %c0_12] : memref<2x128x128xf32, #tpu.memory_space<vmem>>, vector<2x128x128xf32>
    tpu.vector_store %arg4[%c0_10, %c0_11, %c0_12], %25 {strides = array<i32>} : memref<2x128x128xf32, #tpu.memory_space<vmem>>, vector<2x128x128xf32>,
    return
  }
  func.func @transform_0(%arg0: i32) -> (i32, i32, i32) {
    %c0_i32 = arith.constant 0 : i32
    %c0_i32_0 = arith.constant 0 : i32
    %c0_i32_1 = arith.constant 0 : i32
    return %arg0, %c0_i32, %c0_i32_0 : i32, i32, i32
  }
  func.func @transform_1(%arg0: i32) -> (i32, i32) {
    %c0_i32 = arith.constant 0 : i32
    %c0_i32_0 = arith.constant 0 : i32
    %c0_i32_1 = arith.constant 0 : i32
    return %c0_i32, %c0_i32_0 : i32, i32
  }
  func.func @transform_2(%arg0: i32) -> (i32, i32) {
    %c0_i32 = arith.constant 0 : i32
    %c0_i32_0 = arith.constant 0 : i32
    %c0_i32_1 = arith.constant 0 : i32
    return %c0_i32, %c0_i32_0 : i32, i32
  }
  func.func @transform_3(%arg0: i32) -> (i32, i32, i32) {
    %c0_i32 = arith.constant 0 : i32
    %c0_i32_0 = arith.constant 0 : i32
    %c0_i32_1 = arith.constant 0 : i32
    return %arg0, %c0_i32, %c0_i32_0 : i32, i32, i32
  }
}

</mosaic_0001>

<llo_original>
// kernel: tpu_custom_call.1
$region0: #{tpu_custom_call.1}
  #allocation0 [shape = 'u32[]', space=smem, size = 0x4, offset = 0x4, fixed_abs, tag = 'smem constant byte address 0x4 - core index']
  #allocation1 [shape = 'u32[144,128]{1,0:T(1,128)}', space=vmem, size = 0x12000, scoped, tag = 'internal scratch']
  %s0 = inlined_call_operand.hbm [shape: f32[2,128,128], index: 0, kind: input, shape index: {}]
  %s1 = inlined_call_operand.hbm [shape: bf16[128,384], index: 1, kind: input, shape index: {}]
  %s2 = inlined_call_operand.vmem [shape: f32[1,384], index: 2, kind: input, shape index: {}]
  %s3 = inlined_call_operand.hbm [shape: f32[2,128,128], index: 3, kind: output, shape index: {}]
  %s4 = sld [smem:[#allocation0]]
  $region30: #{tpu_custom_call.1} parent=0
    _
  %s6 = ssub.s32 1, %s4
  %s7 = scalar_select 0, %s6, %s4
  $region1: #{tpu_custom_call.1} parent=0
    #allocation2 [shape = 'u8[131072]{0}', space=vmem, size = 0x20000, scoped, tag = 'input window, operand 0, single buffered']
    #allocation3 [shape = 's32[1]{0}', space=sflag, size = 0x4, scoped, tag = 'scoped memory for tpu_custom_call.1']
    #allocation4 [shape = 's32[1]{0}', space=sflag, size = 0x4, scoped, tag = 'scoped memory for tpu_custom_call.1']
    #allocation5 [shape = 'u8[98304]{0}', space=vmem, size = 0x18000, scoped, tag = 'input window, operand 1, single buffered']
    #allocation6 [shape = 's32[1]{0}', space=sflag, size = 0x4, scoped, tag = 'scoped memory for tpu_custom_call.1']
    #allocation7 [shape = 'u8[131072]{0}', space=vmem, size = 0x20000, scoped, tag = 'output window, operand 0, single buffered']
    %8 = vsyncpa [#allocation3], 0
    %9 = vsyncpa [#allocation6], 0
    %10 = vsyncpa [#allocation4], 0
    // Predicated region
    $region2: #{tpu_custom_call.1} parent=1 // pred_check
      _
    $region3: #{tpu_custom_call.1} parent=1 // pred_check_branch
      %12 = sbr.rel (0) target = $region5
    $region4: #{tpu_custom_call.1} parent=1 // pred_region
      %s14 = ssub.s32 4096, 4096
      %15 = vsyncadd [#allocation3], %s14
      %s16 = sshll.u32 [#allocation2], 4
      %s17 = int_to_ptr.vmem [resolvable:$true] %s16
      %22 = dma.hbm_to_vmem [thread:$0]  %s0, 4096, %s17, [#allocation3], 128, 128, 8
    $region5: #{tpu_custom_call.1} parent=1 // pred_fallthru
      _
    // Predicated region
    $region6: #{tpu_custom_call.1} parent=1 // pred_check
      _
    $region7: #{tpu_custom_call.1} parent=1 // pred_check_branch
      %24 = sbr.rel (0) target = $region9
    $region8: #{tpu_custom_call.1} parent=1 // pred_region
      %s26 = ssub.s32 3072, 3072
      %27 = vsyncadd [#allocation6], %s26
      %s28 = sshll.u32 [#allocation5], 4
      %s29 = int_to_ptr.vmem [resolvable:$true] %s28
      %34 = dma.hbm_to_vmem [thread:$0]  %s1, 3072, %s29, [#allocation6], 192, 192, 12
    $region9: #{tpu_custom_call.1} parent=1 // pred_fallthru
      _
    // Predicated region
    $region10: #{tpu_custom_call.1} parent=1 // pred_check
      _
    $region11: #{tpu_custom_call.1} parent=1 // pred_check_branch
      %36 = sbr.rel (0) target = $region13
    $region12: #{tpu_custom_call.1} parent=1 // pred_region
      _
    $region13: #{tpu_custom_call.1} parent=1 // pred_fallthru
      _
    // Predicated region
    $region14: #{tpu_custom_call.1} parent=1 // pred_check
      _
    $region15: #{tpu_custom_call.1} parent=1 // pred_check_branch
      %38 = sbr.rel (0) target = $region17
    $region16: #{tpu_custom_call.1} parent=1 // pred_region
      %39 = dma.done [#allocation3], 4096
    $region17: #{tpu_custom_call.1} parent=1 // pred_fallthru
      _
    // Predicated region
    $region18: #{tpu_custom_call.1} parent=1 // pred_check
      _
    $region19: #{tpu_custom_call.1} parent=1 // pred_check_branch
      %41 = sbr.rel (0) target = $region21
    $region20: #{tpu_custom_call.1} parent=1 // pred_region
      %42 = dma.done [#allocation6], 3072
    $region21: #{tpu_custom_call.1} parent=1 // pred_fallthru
      _
    %v44 = vld [vmem:[#allocation2] sm:$0xff]
    %v45 = vld [vmem:[#allocation2 + $0x8] sm:$0xff]
    %v46 = vld [vmem:[#allocation2 + $0x10] sm:$0xff]
    %v47 = vld [vmem:[#allocation2 + $0x18] sm:$0xff]
    %v48 = vld [vmem:[#allocation2 + $0x20] sm:$0xff]
    %v49 = vld [vmem:[#allocation2 + $0x28] sm:$0xff]
    %v50 = vld [vmem:[#allocation2 + $0x30] sm:$0xff]
    %v51 = vld [vmem:[#allocation2 + $0x38] sm:$0xff]
    %v52 = vld [vmem:[#allocation2 + $0x40] sm:$0xff]
    %v53 = vld [vmem:[#allocation2 + $0x48] sm:$0xff]
    %v54 = vld [vmem:[#allocation2 + $0x50] sm:$0xff]
    %v55 = vld [vmem:[#allocation2 + $0x58] sm:$0xff]
    %v56 = vld [vmem:[#allocation2 + $0x60] sm:$0xff]
    %v57 = vld [vmem:[#allocation2 + $0x68] sm:$0xff]
    %v58 = vld [vmem:[#allocation2 + $0x70] sm:$0xff]
    %v59 = vld [vmem:[#allocation2 + $0x78] sm:$0xff]
    %v60 = vld [vmem:[#allocation2 + $0x80] sm:$0xff]
    %v61 = vld [vmem:[#allocation2 + $0x88] sm:$0xff]
    %v62 = vld [vmem:[#allocation2 + $0x90] sm:$0xff]
    %v63 = vld [vmem:[#allocation2 + $0x98] sm:$0xff]
    %v64 = vld [vmem:[#allocation2 + $0xa0] sm:$0xff]
    %v65 = vld [vmem:[#allocation2 + $0xa8] sm:$0xff]
    %v66 = vld [vmem:[#allocation2 + $0xb0] sm:$0xff]
    %v67 = vld [vmem:[#allocation2 + $0xb8] sm:$0xff]
    %v68 = vld [vmem:[#allocation2 + $0xc0] sm:$0xff]
    %v69 = vld [vmem:[#allocation2 + $0xc8] sm:$0xff]
    %v70 = vld [vmem:[#allocation2 + $0xd0] sm:$0xff]
    %v71 = vld [vmem:[#allocation2 + $0xd8] sm:$0xff]
    %v72 = vld [vmem:[#allocation2 + $0xe0] sm:$0xff]
    %v73 = vld [vmem:[#allocation2 + $0xe8] sm:$0xff]
    %v74 = vld [vmem:[#allocation2 + $0xf0] sm:$0xff]
    %v75 = vld [vmem:[#allocation2 + $0xf8] sm:$0xff]
    %v76 = vpack.c.bf16 %v45, %v44
    %v77 = vpack.c.bf16 %v47, %v46
    %v78 = vpack.c.bf16 %v49, %v48
    %v79 = vpack.c.bf16 %v51, %v50
    %v80 = vpack.c.bf16 %v53, %v52
    %v81 = vpack.c.bf16 %v55, %v54
    %v82 = vpack.c.bf16 %v57, %v56
    %v83 = vpack.c.bf16 %v59, %v58
    %v84 = vpack.c.bf16 %v61, %v60
    %v85 = vpack.c.bf16 %v63, %v62
    %v86 = vpack.c.bf16 %v65, %v64
    %v87 = vpack.c.bf16 %v67, %v66
    %v88 = vpack.c.bf16 %v69, %v68
    %v89 = vpack.c.bf16 %v71, %v70
    %v90 = vpack.c.bf16 %v73, %v72
    %v91 = vpack.c.bf16 %v75, %v74
    %v92 = vld [vmem:[#allocation5] sm:$0xff]
    %v93 = vld [vmem:[#allocation5 + $0x8] sm:$0xf]
    %v94 = vld [vmem:[#allocation5 + $0xc] sm:$0xff]
    %v95 = vld [vmem:[#allocation5 + $0x14] sm:$0xf]
    %v96 = vld [vmem:[#allocation5 + $0x18] sm:$0xff]
    %v97 = vld [vmem:[#allocation5 + $0x20] sm:$0xf]
    %v98 = vld [vmem:[#allocation5 + $0x24] sm:$0xff]
    %v99 = vld [vmem:[#allocation5 + $0x2c] sm:$0xf]
    %v100 = vld [vmem:[#allocation5 + $0x30] sm:$0xff]
    %v101 = vld [vmem:[#allocation5 + $0x38] sm:$0xf]
    %v102 = vld [vmem:[#allocation5 + $0x3c] sm:$0xff]
    %v103 = vld [vmem:[#allocation5 + $0x44] sm:$0xf]
    %v104 = vld [vmem:[#allocation5 + $0x48] sm:$0xff]
    %v105 = vld [vmem:[#allocation5 + $0x50] sm:$0xf]
    %v106 = vld [vmem:[#allocation5 + $0x54] sm:$0xff]
    %v107 = vld [vmem:[#allocation5 + $0x5c] sm:$0xf]
    %v108 = vld [vmem:[#allocation5 + $0x60] sm:$0xff]
    %v109 = vld [vmem:[#allocation5 + $0x68] sm:$0xf]
    %v110 = vld [vmem:[#allocation5 + $0x6c] sm:$0xff]
    %v111 = vld [vmem:[#allocation5 + $0x74] sm:$0xf]
    %v112 = vld [vmem:[#allocation5 + $0x78] sm:$0xff]
    %v113 = vld [vmem:[#allocation5 + $0x80] sm:$0xf]
    %v114 = vld [vmem:[#allocation5 + $0x84] sm:$0xff]
    %v115 = vld [vmem:[#allocation5 + $0x8c] sm:$0xf]
    %v116 = vld [vmem:[#allocation5 + $0x90] sm:$0xff]
    %v117 = vld [vmem:[#allocation5 + $0x98] sm:$0xf]
    %v118 = vld [vmem:[#allocation5 + $0x9c] sm:$0xff]
    %v119 = vld [vmem:[#allocation5 + $0xa4] sm:$0xf]
    %v120 = vld [vmem:[#allocation5 + $0xa8] sm:$0xff]
    %v121 = vld [vmem:[#allocation5 + $0xb0] sm:$0xf]
    %v122 = vld [vmem:[#allocation5 + $0xb4] sm:$0xff]
    %v123 = vld [vmem:[#allocation5 + $0xbc] sm:$0xf]
    %v124 = vld [vmem:[%s2] sm:$0x7]
    %v126 = vlaneseq
    %v127 = vshrl.u32 %v126, 7
    %v128 = vsub.s32 0, %v127
    %v129 = vrot.slane %v124, %v128
    %v130 = vlaneseq
    %v131 = vshrl.u32 %v130, 7
    %v132 = vsub.s32 1, %v131
    %v133 = vrot.slane %v124, %v132
    %v134 = vlaneseq
    %v135 = vshrl.u32 %v134, 7
    %v136 = vsub.s32 2, %v135
    %v137 = vrot.slane %v124, %v136
    %v173 = vunpack.c.l.b16 %v92
    %v174 = vunpack.c.h.b16 %v92
    %v175 = vunpack.c.l.b16 %v93
    %v176 = vunpack.c.l.b16 %v94
    %v177 = vunpack.c.h.b16 %v94
    %v178 = vunpack.c.l.b16 %v95
    %v179 = vunpack.c.l.b16 %v96
    %v180 = vunpack.c.h.b16 %v96
    %v181 = vunpack.c.l.b16 %v97
    %v182 = vunpack.c.l.b16 %v98
    %v183 = vunpack.c.h.b16 %v98
    %v184 = vunpack.c.l.b16 %v99
    %v185 = vunpack.c.l.b16 %v100
    %v186 = vunpack.c.h.b16 %v100
    %v187 = vunpack.c.l.b16 %v101
    %v188 = vunpack.c.l.b16 %v102
    %v189 = vunpack.c.h.b16 %v102
    %v190 = vunpack.c.l.b16 %v103
    %v191 = vunpack.c.l.b16 %v104
    %v192 = vunpack.c.h.b16 %v104
    %v193 = vunpack.c.l.b16 %v105
    %v194 = vunpack.c.l.b16 %v106
    %v195 = vunpack.c.h.b16 %v106
    %v196 = vunpack.c.l.b16 %v107
    %v197 = vunpack.c.l.b16 %v108
    %v198 = vunpack.c.h.b16 %v108
    %v199 = vunpack.c.l.b16 %v109
    %v200 = vunpack.c.l.b16 %v110
    %v201 = vunpack.c.h.b16 %v110
    %v202 = vunpack.c.l.b16 %v111
    %v203 = vunpack.c.l.b16 %v112
    %v204 = vunpack.c.h.b16 %v112
    %v205 = vunpack.c.l.b16 %v113
    %v206 = vunpack.c.l.b16 %v114
    %v207 = vunpack.c.h.b16 %v114
    %v208 = vunpack.c.l.b16 %v115
    %v209 = vunpack.c.l.b16 %v116
    %v210 = vunpack.c.h.b16 %v116
    %v211 = vunpack.c.l.b16 %v117
    %v212 = vunpack.c.l.b16 %v118
    %v213 = vunpack.c.h.b16 %v118
    %v214 = vunpack.c.l.b16 %v119
    %v215 = vunpack.c.l.b16 %v120
    %v216 = vunpack.c.h.b16 %v120
    %v217 = vunpack.c.l.b16 %v121
    %v218 = vunpack.c.l.b16 %v122
    %v219 = vunpack.c.h.b16 %v122
    %v220 = vunpack.c.l.b16 %v123
    %v221 = vpack.c.b16 %v176, %v173
    %v222 = vpack.c.b16 %v177, %v174
    %v223 = vpack.c.b16 %v178, %v175
    %v224 = vpack.c.b16 %v182, %v179
    %v225 = vpack.c.b16 %v183, %v180
    %v226 = vpack.c.b16 %v184, %v181
    %v227 = vpack.c.b16 %v188, %v185
    %v228 = vpack.c.b16 %v189, %v186
    %v229 = vpack.c.b16 %v190, %v187
    %v230 = vpack.c.b16 %v194, %v191
    %v231 = vpack.c.b16 %v195, %v192
    %v232 = vpack.c.b16 %v196, %v193
    %v233 = vpack.c.b16 %v200, %v197
    %v234 = vpack.c.b16 %v201, %v198
    %v235 = vpack.c.b16 %v202, %v199
    %v236 = vpack.c.b16 %v206, %v203
    %v237 = vpack.c.b16 %v207, %v204
    %v238 = vpack.c.b16 %v208, %v205
    %v239 = vpack.c.b16 %v212, %v209
    %v240 = vpack.c.b16 %v213, %v210
    %v241 = vpack.c.b16 %v214, %v211
    %v242 = vpack.c.b16 %v218, %v215
    %v243 = vpack.c.b16 %v219, %v216
    %v244 = vpack.c.b16 %v220, %v217
    %269 = vmatprep.subr.bf16.mxu0 %v243
    %270 = vmatpush1.bf16.msra.mxu0 %v242
    %271 = vmatprep.subr.bf16.mxu0 %v240
    %272 = vmatpush1.bf16.msra.mxu0 %v239
    %273 = vmatprep.subr.bf16.mxu0 %v237
    %274 = vmatpush1.bf16.msra.mxu0 %v236
    %275 = vmatprep.subr.bf16.mxu0 %v234
    %276 = vmatpush1.bf16.msra.mxu0 %v233
    %277 = vmatprep.subr.bf16.mxu0 %v231
    %278 = vmatpush1.bf16.msra.mxu0 %v230
    %279 = vmatprep.subr.bf16.mxu0 %v228
    %280 = vmatpush1.bf16.msra.mxu0 %v227
    %281 = vmatprep.subr.bf16.mxu0 %v225
    %282 = vmatpush1.bf16.msra.mxu0 %v224
    %283 = vmatprep.subr.bf16.mxu0 %v222
    %284 = vmatpush1.bf16.msra.mxu0 %v221
    %285 = vmatprep.subr.bf16.mxu0 0
    %286 = vmatpush2.bf16.msra.mxu0 0
    %287 = vmatprep.subr.bf16.mxu0 0
    %288 = vmatpush2.bf16.msra.mxu0 0
    %289 = vmatprep.subr.bf16.mxu0 0
    %290 = vmatpush2.bf16.msra.mxu0 0
    %291 = vmatprep.subr.bf16.mxu0 0
    %292 = vmatpush2.bf16.msra.mxu0 0
    %293 = vmatprep.subr.bf16.mxu0 0
    %294 = vmatpush2.bf16.msra.mxu0 0
    %295 = vmatprep.subr.bf16.mxu0 0
    %296 = vmatpush2.bf16.msra.mxu0 0
    %297 = vmatprep.subr.bf16.mxu0 0
    %298 = vmatpush2.bf16.msra.mxu0 0
    %299 = vmatprep.subr.bf16.mxu0 0
    %300 = vmatpush2.bf16.msra.mxu0 0
    %301 = vmatprep.mubr.bf16.mxu0 0
    %302 = vmatmul.mubr.bf16.gmra.mxu0 %v76
    %v303 = vpop.f32.mrf.mxu0
    %v304 = vadd.f32 %v129, %v303
    %v305 = vpop.f32.mrf.mxu0
    %v306 = vadd.f32 %v133, %v305
    %v307 = vpop.f32.mrf.mxu0
    %v308 = vadd.f32 %v129, %v307
    %v309 = vpop.f32.mrf.mxu0
    %v310 = vadd.f32 %v133, %v309
    %311 = vmatprep.mubr.bf16.mxu0 0
    %312 = vmatmul.mubr.bf16.gmra.mxu0 %v77
    %v313 = vpop.f32.mrf.mxu0
    %v314 = vadd.f32 %v129, %v313
    %v315 = vpop.f32.mrf.mxu0
    %v316 = vadd.f32 %v133, %v315
    %v317 = vpop.f32.mrf.mxu0
    %v318 = vadd.f32 %v129, %v317
    %v319 = vpop.f32.mrf.mxu0
    %v320 = vadd.f32 %v133, %v319
    %321 = vmatprep.mubr.bf16.mxu0 0
    %322 = vmatmul.mubr.bf16.gmra.mxu0 %v78
    %v323 = vpop.f32.mrf.mxu0
    %v324 = vadd.f32 %v129, %v323
    %v325 = vpop.f32.mrf.mxu0
    %v326 = vadd.f32 %v133, %v325
    %v327 = vpop.f32.mrf.mxu0
    %v328 = vadd.f32 %v129, %v327
    %v329 = vpop.f32.mrf.mxu0
    %v330 = vadd.f32 %v133, %v329
    %331 = vmatprep.mubr.bf16.mxu0 0
    %332 = vmatmul.mubr.bf16.gmra.mxu0 %v79
    %v333 = vpop.f32.mrf.mxu0
    %v334 = vadd.f32 %v129, %v333
    %v335 = vpop.f32.mrf.mxu0
    %v336 = vadd.f32 %v133, %v335
    %v337 = vpop.f32.mrf.mxu0
    %v338 = vadd.f32 %v129, %v337
    %v339 = vpop.f32.mrf.mxu0
    %v340 = vadd.f32 %v133, %v339
    %341 = vmatprep.mubr.bf16.mxu0 0
    %342 = vmatmul.mubr.bf16.gmra.mxu0 %v80
    %v343 = vpop.f32.mrf.mxu0
    %v344 = vadd.f32 %v129, %v343
    %v345 = vpop.f32.mrf.mxu0
    %v346 = vadd.f32 %v133, %v345
    %v347 = vpop.f32.mrf.mxu0
    %v348 = vadd.f32 %v129, %v347
    %v349 = vpop.f32.mrf.mxu0
    %v350 = vadd.f32 %v133, %v349
    %351 = vmatprep.mubr.bf16.mxu0 0
    %352 = vmatmul.mubr.bf16.gmra.mxu0 %v81
    %v353 = vpop.f32.mrf.mxu0
    %v354 = vadd.f32 %v129, %v353
    %v355 = vpop.f32.mrf.mxu0
    %v356 = vadd.f32 %v133, %v355
    %v357 = vpop.f32.mrf.mxu0
    %v358 = vadd.f32 %v129, %v357
    %v359 = vpop.f32.mrf.mxu0
    %v360 = vadd.f32 %v133, %v359
    %361 = vmatprep.mubr.bf16.mxu0 0
    %362 = vmatmul.mubr.bf16.gmra.mxu0 %v82
    %v363 = vpop.f32.mrf.mxu0
    %v364 = vadd.f32 %v129, %v363
    %v365 = vpop.f32.mrf.mxu0
    %v366 = vadd.f32 %v133, %v365
    %v367 = vpop.f32.mrf.mxu0
    %v368 = vadd.f32 %v129, %v367
    %v369 = vpop.f32.mrf.mxu0
    %v370 = vadd.f32 %v133, %v369
    %371 = vmatprep.mubr.bf16.mxu0 0
    %372 = vmatmul.mubr.bf16.gmra.mxu0 %v83
    %v373 = vpop.f32.mrf.mxu0
    %v374 = vadd.f32 %v129, %v373
    %v375 = vpop.f32.mrf.mxu0
    %v376 = vadd.f32 %v133, %v375
    %v377 = vpop.f32.mrf.mxu0
    %v378 = vadd.f32 %v129, %v377
    %v379 = vpop.f32.mrf.mxu0
    %v380 = vadd.f32 %v133, %v379
    %381 = vmatprep.mubr.bf16.mxu0 0
    %382 = vmatmul.mubr.bf16.gmra.mxu0 %v84
    %v383 = vpop.f32.mrf.mxu0
    %v384 = vadd.f32 %v129, %v383
    %v385 = vpop.f32.mrf.mxu0
    %v386 = vadd.f32 %v133, %v385
    %v387 = vpop.f32.mrf.mxu0
    %v388 = vadd.f32 %v129, %v387
    %v389 = vpop.f32.mrf.mxu0
    %v390 = vadd.f32 %v133, %v389
    %391 = vmatprep.mubr.bf16.mxu0 0
    %392 = vmatmul.mubr.bf16.gmra.mxu0 %v85
    %v393 = vpop.f32.mrf.mxu0
    %v394 = vadd.f32 %v129, %v393
    %v395 = vpop.f32.mrf.mxu0
    %v396 = vadd.f32 %v133, %v395
    %v397 = vpop.f32.mrf.mxu0
    %v398 = vadd.f32 %v129, %v397
    %v399 = vpop.f32.mrf.mxu0
    %v400 = vadd.f32 %v133, %v399
    %401 = vmatprep.mubr.bf16.mxu0 0
    %402 = vmatmul.mubr.bf16.gmra.mxu0 %v86
    %v403 = vpop.f32.mrf.mxu0
    %v404 = vadd.f32 %v129, %v403
    %v405 = vpop.f32.mrf.mxu0
    %v406 = vadd.f32 %v133, %v405
    %v407 = vpop.f32.mrf.mxu0
    %v408 = vadd.f32 %v129, %v407
    %v409 = vpop.f32.mrf.mxu0
    %v410 = vadd.f32 %v133, %v409
    %411 = vmatprep.mubr.bf16.mxu0 0
    %412 = vmatmul.mubr.bf16.gmra.mxu0 %v87
    %v413 = vpop.f32.mrf.mxu0
    %v414 = vadd.f32 %v129, %v413
    %v415 = vpop.f32.mrf.mxu0
    %v416 = vadd.f32 %v133, %v415
    %v417 = vpop.f32.mrf.mxu0
    %v418 = vadd.f32 %v129, %v417
    %v419 = vpop.f32.mrf.mxu0
    %v420 = vadd.f32 %v133, %v419
    %421 = vmatprep.mubr.bf16.mxu0 0
    %422 = vmatmul.mubr.bf16.gmra.mxu0 %v88
    %v423 = vpop.f32.mrf.mxu0
    %v424 = vadd.f32 %v129, %v423
    %v425 = vpop.f32.mrf.mxu0
    %v426 = vadd.f32 %v133, %v425
    %v427 = vpop.f32.mrf.mxu0
    %v428 = vadd.f32 %v129, %v427
    %v429 = vpop.f32.mrf.mxu0
    %v430 = vadd.f32 %v133, %v429
    %431 = vmatprep.mubr.bf16.mxu0 0
    %432 = vmatmul.mubr.bf16.gmra.mxu0 %v89
    %v433 = vpop.f32.mrf.mxu0
    %v434 = vadd.f32 %v129, %v433
    %v435 = vpop.f32.mrf.mxu0
    %v436 = vadd.f32 %v133, %v435
    %v437 = vpop.f32.mrf.mxu0
    %v438 = vadd.f32 %v129, %v437
    %v439 = vpop.f32.mrf.mxu0
    %v440 = vadd.f32 %v133, %v439
    %441 = vmatprep.mubr.bf16.mxu0 0
    %442 = vmatmul.mubr.bf16.gmra.mxu0 %v90
    %v443 = vpop.f32.mrf.mxu0
    %v444 = vadd.f32 %v129, %v443
    %v445 = vpop.f32.mrf.mxu0
    %v446 = vadd.f32 %v133, %v445
    %v447 = vpop.f32.mrf.mxu0
    %v448 = vadd.f32 %v129, %v447
    %v449 = vpop.f32.mrf.mxu0
    %v450 = vadd.f32 %v133, %v449
    %451 = vmatprep.mubr.bf16.mxu0 0
    %452 = vmatmul.mubr.bf16.gmra.mxu0 %v91
    %v453 = vpop.f32.mrf.mxu0
    %v454 = vadd.f32 %v129, %v453
    %v455 = vpop.f32.mrf.mxu0
    %v456 = vadd.f32 %v133, %v455
    %v457 = vpop.f32.mrf.mxu0
    %v458 = vadd.f32 %v129, %v457
    %v459 = vpop.f32.mrf.mxu0
    %v460 = vadd.f32 %v133, %v459
    %461 = vdwg.mxu0
    %462 = vmatprep.subr.bf16.mxu0 0
    %463 = vmatpush1.bf16.msra.mxu0 %v244
    %464 = vmatprep.subr.bf16.mxu0 0
    %465 = vmatpush1.bf16.msra.mxu0 %v241
    %466 = vmatprep.subr.bf16.mxu0 0
    %467 = vmatpush1.bf16.msra.mxu0 %v238
    %468 = vmatprep.subr.bf16.mxu0 0
    %469 = vmatpush1.bf16.msra.mxu0 %v235
    %470 = vmatprep.subr.bf16.mxu0 0
    %471 = vmatpush1.bf16.msra.mxu0 %v232
    %472 = vmatprep.subr.bf16.mxu0 0
    %473 = vmatpush1.bf16.msra.mxu0 %v229
    %474 = vmatprep.subr.bf16.mxu0 0
    %475 = vmatpush1.bf16.msra.mxu0 %v226
    %476 = vmatprep.subr.bf16.mxu0 0
    %477 = vmatpush1.bf16.msra.mxu0 %v223
    %478 = vmatprep.subr.bf16.mxu0 0
    %479 = vmatpush2.bf16.msra.mxu0 0
    %480 = vmatprep.subr.bf16.mxu0 0
    %481 = vmatpush2.bf16.msra.mxu0 0
    %482 = vmatprep.subr.bf16.mxu0 0
    %483 = vmatpush2.bf16.msra.mxu0 0
    %484 = vmatprep.subr.bf16.mxu0 0
    %485 = vmatpush2.bf16.msra.mxu0 0
    %486 = vmatprep.subr.bf16.mxu0 0
    %487 = vmatpush2.bf16.msra.mxu0 0
    %488 = vmatprep.subr.bf16.mxu0 0
    %489 = vmatpush2.bf16.msra.mxu0 0
    %490 = vmatprep.subr.bf16.mxu0 0
    %491 = vmatpush2.bf16.msra.mxu0 0
    %492 = vmatprep.subr.bf16.mxu0 0
    %493 = vmatpush2.bf16.msra.mxu0 0
    %494 = vmatprep.mubr.bf16.mxu0 0
    %495 = vmatmul.mubr.bf16.gmra.mxu0 %v76
    %v496 = vpop.f32.mrf.mxu0
    %v497 = vadd.f32 %v137, %v496
    %v498 = vpop.f32.mrf.mxu0
    %v499 = vpop.f32.mrf.mxu0
    %v500 = vadd.f32 %v137, %v499
    %v501 = vpop.f32.mrf.mxu0
    %502 = vmatprep.mubr.bf16.mxu0 0
    %503 = vmatmul.mubr.bf16.gmra.mxu0 %v77
    %v504 = vpop.f32.mrf.mxu0
    %v505 = vadd.f32 %v137, %v504
    %v506 = vpop.f32.mrf.mxu0
    %v507 = vpop.f32.mrf.mxu0
    %v508 = vadd.f32 %v137, %v507
    %v509 = vpop.f32.mrf.mxu0
    %510 = vmatprep.mubr.bf16.mxu0 0
    %511 = vmatmul.mubr.bf16.gmra.mxu0 %v78
    %v512 = vpop.f32.mrf.mxu0
    %v513 = vadd.f32 %v137, %v512
    %v514 = vpop.f32.mrf.mxu0
    %v515 = vpop.f32.mrf.mxu0
    %v516 = vadd.f32 %v137, %v515
    %v517 = vpop.f32.mrf.mxu0
    %518 = vmatprep.mubr.bf16.mxu0 0
    %519 = vmatmul.mubr.bf16.gmra.mxu0 %v79
    %v520 = vpop.f32.mrf.mxu0
    %v521 = vadd.f32 %v137, %v520
    %v522 = vpop.f32.mrf.mxu0
    %v523 = vpop.f32.mrf.mxu0
    %v524 = vadd.f32 %v137, %v523
    %v525 = vpop.f32.mrf.mxu0
    %526 = vmatprep.mubr.bf16.mxu0 0
    %527 = vmatmul.mubr.bf16.gmra.mxu0 %v80
    %v528 = vpop.f32.mrf.mxu0
    %v529 = vadd.f32 %v137, %v528
    %v530 = vpop.f32.mrf.mxu0
    %v531 = vpop.f32.mrf.mxu0
    %v532 = vadd.f32 %v137, %v531
    %v533 = vpop.f32.mrf.mxu0
    %534 = vmatprep.mubr.bf16.mxu0 0
    %535 = vmatmul.mubr.bf16.gmra.mxu0 %v81
    %v536 = vpop.f32.mrf.mxu0
    %v537 = vadd.f32 %v137, %v536
    %v538 = vpop.f32.mrf.mxu0
    %v539 = vpop.f32.mrf.mxu0
    %v540 = vadd.f32 %v137, %v539
    %v541 = vpop.f32.mrf.mxu0
    %542 = vmatprep.mubr.bf16.mxu0 0
    %543 = vmatmul.mubr.bf16.gmra.mxu0 %v82
    %v544 = vpop.f32.mrf.mxu0
    %v545 = vadd.f32 %v137, %v544
    %v546 = vpop.f32.mrf.mxu0
    %v547 = vpop.f32.mrf.mxu0
    %v548 = vadd.f32 %v137, %v547
    %v549 = vpop.f32.mrf.mxu0
    %550 = vmatprep.mubr.bf16.mxu0 0
    %551 = vmatmul.mubr.bf16.gmra.mxu0 %v83
    %v552 = vpop.f32.mrf.mxu0
    %v553 = vadd.f32 %v137, %v552
    %v554 = vpop.f32.mrf.mxu0
    %v555 = vpop.f32.mrf.mxu0
    %v556 = vadd.f32 %v137, %v555
    %v557 = vpop.f32.mrf.mxu0
    %558 = vmatprep.mubr.bf16.mxu0 0
    %559 = vmatmul.mubr.bf16.gmra.mxu0 %v84
    %v560 = vpop.f32.mrf.mxu0
    %v561 = vadd.f32 %v137, %v560
    %v562 = vpop.f32.mrf.mxu0
    %v563 = vpop.f32.mrf.mxu0
    %v564 = vadd.f32 %v137, %v563
    %v565 = vpop.f32.mrf.mxu0
    %566 = vmatprep.mubr.bf16.mxu0 0
    %567 = vmatmul.mubr.bf16.gmra.mxu0 %v85
    %v568 = vpop.f32.mrf.mxu0
    %v569 = vadd.f32 %v137, %v568
    %v570 = vpop.f32.mrf.mxu0
    %v571 = vpop.f32.mrf.mxu0
    %v572 = vadd.f32 %v137, %v571
    %v573 = vpop.f32.mrf.mxu0
    %574 = vmatprep.mubr.bf16.mxu0 0
    %575 = vmatmul.mubr.bf16.gmra.mxu0 %v86
    %v576 = vpop.f32.mrf.mxu0
    %v577 = vadd.f32 %v137, %v576
    %v578 = vpop.f32.mrf.mxu0
    %v579 = vpop.f32.mrf.mxu0
    %v580 = vadd.f32 %v137, %v579
    %v581 = vpop.f32.mrf.mxu0
    %582 = vmatprep.mubr.bf16.mxu0 0
    %583 = vmatmul.mubr.bf16.gmra.mxu0 %v87
    %v584 = vpop.f32.mrf.mxu0
    %v585 = vadd.f32 %v137, %v584
    %v586 = vpop.f32.mrf.mxu0
    %v587 = vpop.f32.mrf.mxu0
    %v588 = vadd.f32 %v137, %v587
    %v589 = vpop.f32.mrf.mxu0
    %590 = vmatprep.mubr.bf16.mxu0 0
    %591 = vmatmul.mubr.bf16.gmra.mxu0 %v88
    %v592 = vpop.f32.mrf.mxu0
    %v593 = vadd.f32 %v137, %v592
    %v594 = vpop.f32.mrf.mxu0
    %v595 = vpop.f32.mrf.mxu0
    %v596 = vadd.f32 %v137, %v595
    %v597 = vpop.f32.mrf.mxu0
    %598 = vmatprep.mubr.bf16.mxu0 0
    %599 = vmatmul.mubr.bf16.gmra.mxu0 %v89
    %v600 = vpop.f32.mrf.mxu0
    %v601 = vadd.f32 %v137, %v600
    %v602 = vpop.f32.mrf.mxu0
    %v603 = vpop.f32.mrf.mxu0
    %v604 = vadd.f32 %v137, %v603
    %v605 = vpop.f32.mrf.mxu0
    %606 = vmatprep.mubr.bf16.mxu0 0
    %607 = vmatmul.mubr.bf16.gmra.mxu0 %v90
    %v608 = vpop.f32.mrf.mxu0
    %v609 = vadd.f32 %v137, %v608
    %v610 = vpop.f32.mrf.mxu0
    %v611 = vpop.f32.mrf.mxu0
    %v612 = vadd.f32 %v137, %v611
    %v613 = vpop.f32.mrf.mxu0
    %614 = vmatprep.mubr.bf16.mxu0 0
    %615 = vmatmul.mubr.bf16.gmra.mxu0 %v91
    %v616 = vpop.f32.mrf.mxu0
    %v617 = vadd.f32 %v137, %v616
    %v618 = vpop.f32.mrf.mxu0
    %v619 = vpop.f32.mrf.mxu0
    %v620 = vadd.f32 %v137, %v619
    %v621 = vpop.f32.mrf.mxu0
    %622 = vdwg.mxu0
    %v623 = vpack.c.bf16 %v308, %v304
    %v624 = vpack.c.bf16 %v310, %v306
    %v625 = vpack.c.bf16 %v500, %v497
    %v626 = vpack.c.bf16 %v318, %v314
    %v627 = vpack.c.bf16 %v320, %v316
    %v628 = vpack.c.bf16 %v508, %v505
    %v629 = vpack.c.bf16 %v328, %v324
    %v630 = vpack.c.bf16 %v330, %v326
    %v631 = vpack.c.bf16 %v516, %v513
    %v632 = vpack.c.bf16 %v338, %v334
    %v633 = vpack.c.bf16 %v340, %v336
    %v634 = vpack.c.bf16 %v524, %v521
    %v635 = vpack.c.bf16 %v348, %v344
    %v636 = vpack.c.bf16 %v350, %v346
    %v637 = vpack.c.bf16 %v532, %v529
    %v638 = vpack.c.bf16 %v358, %v354
    %v639 = vpack.c.bf16 %v360, %v356
    %v640 = vpack.c.bf16 %v540, %v537
    %v641 = vpack.c.bf16 %v368, %v364
    %v642 = vpack.c.bf16 %v370, %v366
    %v643 = vpack.c.bf16 %v548, %v545
    %v644 = vpack.c.bf16 %v378, %v374
    %v645 = vpack.c.bf16 %v380, %v376
    %v646 = vpack.c.bf16 %v556, %v553
    %v647 = vpack.c.bf16 %v388, %v384
    %v648 = vpack.c.bf16 %v390, %v386
    %v649 = vpack.c.bf16 %v564, %v561
    %v650 = vpack.c.bf16 %v398, %v394
    %v651 = vpack.c.bf16 %v400, %v396
    %v652 = vpack.c.bf16 %v572, %v569
    %v653 = vpack.c.bf16 %v408, %v404
    %v654 = vpack.c.bf16 %v410, %v406
    %v655 = vpack.c.bf16 %v580, %v577
    %v656 = vpack.c.bf16 %v418, %v414
    %v657 = vpack.c.bf16 %v420, %v416
    %v658 = vpack.c.bf16 %v588, %v585
    %v659 = vpack.c.bf16 %v428, %v424
    %v660 = vpack.c.bf16 %v430, %v426
    %v661 = vpack.c.bf16 %v596, %v593
    %v662 = vpack.c.bf16 %v438, %v434
    %v663 = vpack.c.bf16 %v440, %v436
    %v664 = vpack.c.bf16 %v604, %v601
    %v665 = vpack.c.bf16 %v448, %v444
    %v666 = vpack.c.bf16 %v450, %v446
    %v667 = vpack.c.bf16 %v612, %v609
    %v668 = vpack.c.bf16 %v458, %v454
    %v669 = vpack.c.bf16 %v460, %v456
    %v670 = vpack.c.bf16 %v620, %v617
    %671 = vmatprep.subr.bf16.mxu0 0
    %672 = vmatpush1.bf16.xpose.msra.mxu0 %v645
    %673 = vmatprep.subr.bf16.mxu0 0
    %674 = vmatpush1.bf16.xpose.msra.mxu0 %v642
    %675 = vmatprep.subr.bf16.mxu0 0
    %676 = vmatpush1.bf16.xpose.msra.mxu0 %v639
    %677 = vmatprep.subr.bf16.mxu0 0
    %678 = vmatpush1.bf16.xpose.msra.mxu0 %v636
    %679 = vmatprep.subr.bf16.mxu0 0
    %680 = vmatpush1.bf16.xpose.msra.mxu0 %v633
    %681 = vmatprep.subr.bf16.mxu0 0
    %682 = vmatpush1.bf16.xpose.msra.mxu0 %v630
    %683 = vmatprep.subr.bf16.mxu0 0
    %684 = vmatpush1.bf16.xpose.msra.mxu0 %v627
    %685 = vmatprep.subr.bf16.mxu0 0
    %686 = vmatpush1.bf16.xpose.msra.mxu0 %v624
    %687 = vmatprep.subr.bf16.mxu0 0
    %688 = vmatpush2.bf16.xpose.msra.mxu0 0
    %689 = vmatprep.subr.bf16.mxu0 0
    %690 = vmatpush2.bf16.xpose.msra.mxu0 0
    %691 = vmatprep.subr.bf16.mxu0 0
    %692 = vmatpush2.bf16.xpose.msra.mxu0 0
    %693 = vmatprep.subr.bf16.mxu0 0
    %694 = vmatpush2.bf16.xpose.msra.mxu0 0
    %695 = vmatprep.subr.bf16.mxu0 0
    %696 = vmatpush2.bf16.xpose.msra.mxu0 0
    %697 = vmatprep.subr.bf16.mxu0 0
    %698 = vmatpush2.bf16.xpose.msra.mxu0 0
    %699 = vmatprep.subr.bf16.mxu0 0
    %700 = vmatpush2.bf16.xpose.msra.mxu0 0
    %701 = vmatprep.subr.bf16.mxu0 0
    %702 = vmatpush2.bf16.xpose.msra.mxu0 0
    %703 = vmatprep.mubr.bf16.mxu0 0
    %704 = vmatmul.mubr.bf16.gmra.mxu0 %v623
    %v705 = vpop.f32.mrf.mxu0
    %v706 = vadd.f32 0.0, %v705
    %v707 = vpop.f32.mrf.mxu0
    %v708 = vpop.f32.mrf.mxu0
    %v709 = vadd.f32 0.0, %v708
    %v710 = vpop.f32.mrf.mxu0
    %711 = vmatprep.mubr.bf16.mxu0 0
    %712 = vmatmul.mubr.bf16.gmra.mxu0 %v626
    %v713 = vpop.f32.mrf.mxu0
    %v714 = vadd.f32 0.0, %v713
    %v715 = vpop.f32.mrf.mxu0
    %v716 = vpop.f32.mrf.mxu0
    %v717 = vadd.f32 0.0, %v716
    %v718 = vpop.f32.mrf.mxu0
    %719 = vmatprep.mubr.bf16.mxu0 0
    %720 = vmatmul.mubr.bf16.gmra.mxu0 %v629
    %v721 = vpop.f32.mrf.mxu0
    %v722 = vadd.f32 0.0, %v721
    %v723 = vpop.f32.mrf.mxu0
    %v724 = vpop.f32.mrf.mxu0
    %v725 = vadd.f32 0.0, %v724
    %v726 = vpop.f32.mrf.mxu0
    %727 = vmatprep.mubr.bf16.mxu0 0
    %728 = vmatmul.mubr.bf16.gmra.mxu0 %v632
    %v729 = vpop.f32.mrf.mxu0
    %v730 = vadd.f32 0.0, %v729
    %v731 = vpop.f32.mrf.mxu0
    %v732 = vpop.f32.mrf.mxu0
    %v733 = vadd.f32 0.0, %v732
    %v734 = vpop.f32.mrf.mxu0
    %735 = vmatprep.mubr.bf16.mxu0 0
    %736 = vmatmul.mubr.bf16.gmra.mxu0 %v635
    %v737 = vpop.f32.mrf.mxu0
    %v738 = vadd.f32 0.0, %v737
    %v739 = vpop.f32.mrf.mxu0
    %v740 = vpop.f32.mrf.mxu0
    %v741 = vadd.f32 0.0, %v740
    %v742 = vpop.f32.mrf.mxu0
    %743 = vmatprep.mubr.bf16.mxu0 0
    %744 = vmatmul.mubr.bf16.gmra.mxu0 %v638
    %v745 = vpop.f32.mrf.mxu0
    %v746 = vadd.f32 0.0, %v745
    %v747 = vpop.f32.mrf.mxu0
    %v748 = vpop.f32.mrf.mxu0
    %v749 = vadd.f32 0.0, %v748
    %v750 = vpop.f32.mrf.mxu0
    %751 = vmatprep.mubr.bf16.mxu0 0
    %752 = vmatmul.mubr.bf16.gmra.mxu0 %v641
    %v753 = vpop.f32.mrf.mxu0
    %v754 = vadd.f32 0.0, %v753
    %v755 = vpop.f32.mrf.mxu0
    %v756 = vpop.f32.mrf.mxu0
    %v757 = vadd.f32 0.0, %v756
    %v758 = vpop.f32.mrf.mxu0
    %759 = vmatprep.mubr.bf16.mxu0 0
    %760 = vmatmul.mubr.bf16.gmra.mxu0 %v644
    %v761 = vpop.f32.mrf.mxu0
    %v762 = vadd.f32 0.0, %v761
    %v763 = vpop.f32.mrf.mxu0
    %v764 = vpop.f32.mrf.mxu0
    %v765 = vadd.f32 0.0, %v764
    %v766 = vpop.f32.mrf.mxu0
    %767 = vdwg.mxu0
    %768 = vmatprep.subr.bf16.mxu0 0
    %769 = vmatpush1.bf16.xpose.msra.mxu0 %v669
    %770 = vmatprep.subr.bf16.mxu0 0
    %771 = vmatpush1.bf16.xpose.msra.mxu0 %v666
    %772 = vmatprep.subr.bf16.mxu0 0
    %773 = vmatpush1.bf16.xpose.msra.mxu0 %v663
    %774 = vmatprep.subr.bf16.mxu0 0
    %775 = vmatpush1.bf16.xpose.msra.mxu0 %v660
    %776 = vmatprep.subr.bf16.mxu0 0
    %777 = vmatpush1.bf16.xpose.msra.mxu0 %v657
    %778 = vmatprep.subr.bf16.mxu0 0
    %779 = vmatpush1.bf16.xpose.msra.mxu0 %v654
    %780 = vmatprep.subr.bf16.mxu0 0
    %781 = vmatpush1.bf16.xpose.msra.mxu0 %v651
    %782 = vmatprep.subr.bf16.mxu0 0
    %783 = vmatpush1.bf16.xpose.msra.mxu0 %v648
    %784 = vmatprep.subr.bf16.mxu0 0
    %785 = vmatpush2.bf16.xpose.msra.mxu0 0
    %786 = vmatprep.subr.bf16.mxu0 0
    %787 = vmatpush2.bf16.xpose.msra.mxu0 0
    %788 = vmatprep.subr.bf16.mxu0 0
    %789 = vmatpush2.bf16.xpose.msra.mxu0 0
    %790 = vmatprep.subr.bf16.mxu0 0
    %791 = vmatpush2.bf16.xpose.msra.mxu0 0
    %792 = vmatprep.subr.bf16.mxu0 0
    %793 = vmatpush2.bf16.xpose.msra.mxu0 0
    %794 = vmatprep.subr.bf16.mxu0 0
    %795 = vmatpush2.bf16.xpose.msra.mxu0 0
    %796 = vmatprep.subr.bf16.mxu0 0
    %797 = vmatpush2.bf16.xpose.msra.mxu0 0
    %798 = vmatprep.subr.bf16.mxu0 0
    %799 = vmatpush2.bf16.xpose.msra.mxu0 0
    %800 = vmatprep.mubr.bf16.mxu0 0
    %801 = vmatmul.mubr.bf16.gmra.mxu0 %v647
    %v802 = vpop.f32.mrf.mxu0
    %v803 = vadd.f32 0.0, %v802
    %v804 = vpop.f32.mrf.mxu0
    %v805 = vpop.f32.mrf.mxu0
    %v806 = vadd.f32 0.0, %v805
    %v807 = vpop.f32.mrf.mxu0
    %808 = vmatprep.mubr.bf16.mxu0 0
    %809 = vmatmul.mubr.bf16.gmra.mxu0 %v650
    %v810 = vpop.f32.mrf.mxu0
    %v811 = vadd.f32 0.0, %v810
    %v812 = vpop.f32.mrf.mxu0
    %v813 = vpop.f32.mrf.mxu0
    %v814 = vadd.f32 0.0, %v813
    %v815 = vpop.f32.mrf.mxu0
    %816 = vmatprep.mubr.bf16.mxu0 0
    %817 = vmatmul.mubr.bf16.gmra.mxu0 %v653
    %v818 = vpop.f32.mrf.mxu0
    %v819 = vadd.f32 0.0, %v818
    %v820 = vpop.f32.mrf.mxu0
    %v821 = vpop.f32.mrf.mxu0
    %v822 = vadd.f32 0.0, %v821
    %v823 = vpop.f32.mrf.mxu0
    %824 = vmatprep.mubr.bf16.mxu0 0
    %825 = vmatmul.mubr.bf16.gmra.mxu0 %v656
    %v826 = vpop.f32.mrf.mxu0
    %v827 = vadd.f32 0.0, %v826
    %v828 = vpop.f32.mrf.mxu0
    %v829 = vpop.f32.mrf.mxu0
    %v830 = vadd.f32 0.0, %v829
    %v831 = vpop.f32.mrf.mxu0
    %832 = vmatprep.mubr.bf16.mxu0 0
    %833 = vmatmul.mubr.bf16.gmra.mxu0 %v659
    %v834 = vpop.f32.mrf.mxu0
    %v835 = vadd.f32 0.0, %v834
    %v836 = vpop.f32.mrf.mxu0
    %v837 = vpop.f32.mrf.mxu0
    %v838 = vadd.f32 0.0, %v837
    %v839 = vpop.f32.mrf.mxu0
    %840 = vmatprep.mubr.bf16.mxu0 0
    %841 = vmatmul.mubr.bf16.gmra.mxu0 %v662
    %v842 = vpop.f32.mrf.mxu0
    %v843 = vadd.f32 0.0, %v842
    %v844 = vpop.f32.mrf.mxu0
    %v845 = vpop.f32.mrf.mxu0
    %v846 = vadd.f32 0.0, %v845
    %v847 = vpop.f32.mrf.mxu0
    %848 = vmatprep.mubr.bf16.mxu0 0
    %849 = vmatmul.mubr.bf16.gmra.mxu0 %v665
    %v850 = vpop.f32.mrf.mxu0
    %v851 = vadd.f32 0.0, %v850
    %v852 = vpop.f32.mrf.mxu0
    %v853 = vpop.f32.mrf.mxu0
    %v854 = vadd.f32 0.0, %v853
    %v855 = vpop.f32.mrf.mxu0
    %856 = vmatprep.mubr.bf16.mxu0 0
    %857 = vmatmul.mubr.bf16.gmra.mxu0 %v668
    %v858 = vpop.f32.mrf.mxu0
    %v859 = vadd.f32 0.0, %v858
    %v860 = vpop.f32.mrf.mxu0
    %v861 = vpop.f32.mrf.mxu0
    %v862 = vadd.f32 0.0, %v861
    %v863 = vpop.f32.mrf.mxu0
    %864 = vdwg.mxu0
    %865 = vmax.xlane.f32.xlu0 %v706
    %v866 = vpop.xlane.xlu0 %865
    %867 = vmax.xlane.f32.xlu0 %v709
    %v868 = vpop.xlane.xlu0 %867
    %869 = vmax.xlane.f32.xlu0 %v714
    %v870 = vpop.xlane.xlu0 %869
    %871 = vmax.xlane.f32.xlu0 %v717
    %v872 = vpop.xlane.xlu0 %871
    %873 = vmax.xlane.f32.xlu0 %v722
    %v874 = vpop.xlane.xlu0 %873
    %875 = vmax.xlane.f32.xlu0 %v725
    %v876 = vpop.xlane.xlu0 %875
    %877 = vmax.xlane.f32.xlu0 %v730
    %v878 = vpop.xlane.xlu0 %877
    %879 = vmax.xlane.f32.xlu0 %v733
    %v880 = vpop.xlane.xlu0 %879
    %881 = vmax.xlane.f32.xlu0 %v738
    %v882 = vpop.xlane.xlu0 %881
    %883 = vmax.xlane.f32.xlu0 %v741
    %v884 = vpop.xlane.xlu0 %883
    %885 = vmax.xlane.f32.xlu0 %v746
    %v886 = vpop.xlane.xlu0 %885
    %887 = vmax.xlane.f32.xlu0 %v749
    %v888 = vpop.xlane.xlu0 %887
    %889 = vmax.xlane.f32.xlu0 %v754
    %v890 = vpop.xlane.xlu0 %889
    %891 = vmax.xlane.f32.xlu0 %v757
    %v892 = vpop.xlane.xlu0 %891
    %893 = vmax.xlane.f32.xlu0 %v762
    %v894 = vpop.xlane.xlu0 %893
    %895 = vmax.xlane.f32.xlu0 %v765
    %v896 = vpop.xlane.xlu0 %895
    %897 = vmax.xlane.f32.xlu0 %v803
    %v898 = vpop.xlane.xlu0 %897
    %899 = vmax.xlane.f32.xlu0 %v806
    %v900 = vpop.xlane.xlu0 %899
    %901 = vmax.xlane.f32.xlu0 %v811
    %v902 = vpop.xlane.xlu0 %901
    %903 = vmax.xlane.f32.xlu0 %v814
    %v904 = vpop.xlane.xlu0 %903
    %905 = vmax.xlane.f32.xlu0 %v819
    %v906 = vpop.xlane.xlu0 %905
    %907 = vmax.xlane.f32.xlu0 %v822
    %v908 = vpop.xlane.xlu0 %907
    %909 = vmax.xlane.f32.xlu0 %v827
    %v910 = vpop.xlane.xlu0 %909
    %911 = vmax.xlane.f32.xlu0 %v830
    %v912 = vpop.xlane.xlu0 %911
    %913 = vmax.xlane.f32.xlu0 %v835
    %v914 = vpop.xlane.xlu0 %913
    %915 = vmax.xlane.f32.xlu0 %v838
    %v916 = vpop.xlane.xlu0 %915
    %917 = vmax.xlane.f32.xlu0 %v843
    %v918 = vpop.xlane.xlu0 %917
    %919 = vmax.xlane.f32.xlu0 %v846
    %v920 = vpop.xlane.xlu0 %919
    %921 = vmax.xlane.f32.xlu0 %v851
    %v922 = vpop.xlane.xlu0 %921
    %923 = vmax.xlane.f32.xlu0 %v854
    %v924 = vpop.xlane.xlu0 %923
    %925 = vmax.xlane.f32.xlu0 %v859
    %v926 = vpop.xlane.xlu0 %925
    %927 = vmax.xlane.f32.xlu0 %v862
    %v928 = vpop.xlane.xlu0 %927
    %v929 = vsub.f32 %v706, %v866
    %v930 = vsub.f32 %v709, %v868
    %v931 = vsub.f32 %v714, %v870
    %v932 = vsub.f32 %v717, %v872
    %v933 = vsub.f32 %v722, %v874
    %v934 = vsub.f32 %v725, %v876
    %v935 = vsub.f32 %v730, %v878
    %v936 = vsub.f32 %v733, %v880
    %v937 = vsub.f32 %v738, %v882
    %v938 = vsub.f32 %v741, %v884
    %v939 = vsub.f32 %v746, %v886
    %v940 = vsub.f32 %v749, %v888
    %v941 = vsub.f32 %v754, %v890
    %v942 = vsub.f32 %v757, %v892
    %v943 = vsub.f32 %v762, %v894
    %v944 = vsub.f32 %v765, %v896
    %v945 = vsub.f32 %v803, %v898
    %v946 = vsub.f32 %v806, %v900
    %v947 = vsub.f32 %v811, %v902
    %v948 = vsub.f32 %v814, %v904
    %v949 = vsub.f32 %v819, %v906
    %v950 = vsub.f32 %v822, %v908
    %v951 = vsub.f32 %v827, %v910
    %v952 = vsub.f32 %v830, %v912
    %v953 = vsub.f32 %v835, %v914
    %v954 = vsub.f32 %v838, %v916
    %v955 = vsub.f32 %v843, %v918
    %v956 = vsub.f32 %v846, %v920
    %v957 = vsub.f32 %v851, %v922
    %v958 = vsub.f32 %v854, %v924
    %v959 = vsub.f32 %v859, %v926
    %v960 = vsub.f32 %v862, %v928
    %v961 = vmul.f32 %v929, 1.442695
    %v962 = vpow.pop %v961
    %v963 = vmul.f32 %v930, 1.442695
    %v964 = vpow.pop %v963
    %v965 = vmul.f32 %v931, 1.442695
    %v966 = vpow.pop %v965
    %v967 = vmul.f32 %v932, 1.442695
    %v968 = vpow.pop %v967
    %v969 = vmul.f32 %v933, 1.442695
    %v970 = vpow.pop %v969
    %v971 = vmul.f32 %v934, 1.442695
    %v972 = vpow.pop %v971
    %v973 = vmul.f32 %v935, 1.442695
    %v974 = vpow.pop %v973
    %v975 = vmul.f32 %v936, 1.442695
    %v976 = vpow.pop %v975
    %v977 = vmul.f32 %v937, 1.442695
    %v978 = vpow.pop %v977
    %v979 = vmul.f32 %v938, 1.442695
    %v980 = vpow.pop %v979
    %v981 = vmul.f32 %v939, 1.442695
    %v982 = vpow.pop %v981
    %v983 = vmul.f32 %v940, 1.442695
    %v984 = vpow.pop %v983
    %v985 = vmul.f32 %v941, 1.442695
    %v986 = vpow.pop %v985
    %v987 = vmul.f32 %v942, 1.442695
    %v988 = vpow.pop %v987
    %v989 = vmul.f32 %v943, 1.442695
    %v990 = vpow.pop %v989
    %v991 = vmul.f32 %v944, 1.442695
    %v992 = vpow.pop %v991
    %v993 = vmul.f32 %v945, 1.442695
    %v994 = vpow.pop %v993
    %v995 = vmul.f32 %v946, 1.442695
    %v996 = vpow.pop %v995
    %v997 = vmul.f32 %v947, 1.442695
    %v998 = vpow.pop %v997
    %v999 = vmul.f32 %v948, 1.442695
    %v1000 = vpow.pop %v999
    %v1001 = vmul.f32 %v949, 1.442695
    %v1002 = vpow.pop %v1001
    %v1003 = vmul.f32 %v950, 1.442695
    %v1004 = vpow.pop %v1003
    %v1005 = vmul.f32 %v951, 1.442695
    %v1006 = vpow.pop %v1005
    %v1007 = vmul.f32 %v952, 1.442695
    %v1008 = vpow.pop %v1007
    %v1009 = vmul.f32 %v953, 1.442695
    %v1010 = vpow.pop %v1009
    %v1011 = vmul.f32 %v954, 1.442695
    %v1012 = vpow.pop %v1011
    %v1013 = vmul.f32 %v955, 1.442695
    %v1014 = vpow.pop %v1013
    %v1015 = vmul.f32 %v956, 1.442695
    %v1016 = vpow.pop %v1015
    %v1017 = vmul.f32 %v957, 1.442695
    %v1018 = vpow.pop %v1017
    %v1019 = vmul.f32 %v958, 1.442695
    %v1020 = vpow.pop %v1019
    %v1021 = vmul.f32 %v959, 1.442695
    %v1022 = vpow.pop %v1021
    %v1023 = vmul.f32 %v960, 1.442695
    %v1024 = vpow.pop %v1023
    %1025 = vadd.xlane.f32.xlu0 %v962
    %v1026 = vpop.xlane.xlu0 %1025
    %1027 = vadd.xlane.f32.xlu0 %v964
    %v1028 = vpop.xlane.xlu0 %1027
    %1029 = vadd.xlane.f32.xlu0 %v966
    %v1030 = vpop.xlane.xlu0 %1029
    %1031 = vadd.xlane.f32.xlu0 %v968
    %v1032 = vpop.xlane.xlu0 %1031
    %1033 = vadd.xlane.f32.xlu0 %v970
    %v1034 = vpop.xlane.xlu0 %1033
    %1035 = vadd.xlane.f32.xlu0 %v972
    %v1036 = vpop.xlane.xlu0 %1035
    %1037 = vadd.xlane.f32.xlu0 %v974
    %v1038 = vpop.xlane.xlu0 %1037
    %1039 = vadd.xlane.f32.xlu0 %v976
    %v1040 = vpop.xlane.xlu0 %1039
    %1041 = vadd.xlane.f32.xlu0 %v978
    %v1042 = vpop.xlane.xlu0 %1041
    %1043 = vadd.xlane.f32.xlu0 %v980
    %v1044 = vpop.xlane.xlu0 %1043
    %1045 = vadd.xlane.f32.xlu0 %v982
    %v1046 = vpop.xlane.xlu0 %1045
    %1047 = vadd.xlane.f32.xlu0 %v984
    %v1048 = vpop.xlane.xlu0 %1047
    %1049 = vadd.xlane.f32.xlu0 %v986
    %v1050 = vpop.xlane.xlu0 %1049
    %1051 = vadd.xlane.f32.xlu0 %v988
    %v1052 = vpop.xlane.xlu0 %1051
    %1053 = vadd.xlane.f32.xlu0 %v990
    %v1054 = vpop.xlane.xlu0 %1053
    %1055 = vadd.xlane.f32.xlu0 %v992
    %v1056 = vpop.xlane.xlu0 %1055
    %1057 = vadd.xlane.f32.xlu0 %v994
    %v1058 = vpop.xlane.xlu0 %1057
    %1059 = vadd.xlane.f32.xlu0 %v996
    %v1060 = vpop.xlane.xlu0 %1059
    %1061 = vadd.xlane.f32.xlu0 %v998
    %v1062 = vpop.xlane.xlu0 %1061
    %1063 = vadd.xlane.f32.xlu0 %v1000
    %v1064 = vpop.xlane.xlu0 %1063
    %1065 = vadd.xlane.f32.xlu0 %v1002
    %v1066 = vpop.xlane.xlu0 %1065
    %1067 = vadd.xlane.f32.xlu0 %v1004
    %v1068 = vpop.xlane.xlu0 %1067
    %1069 = vadd.xlane.f32.xlu0 %v1006
    %v1070 = vpop.xlane.xlu0 %1069
    %1071 = vadd.xlane.f32.xlu0 %v1008
    %v1072 = vpop.xlane.xlu0 %1071
    %1073 = vadd.xlane.f32.xlu0 %v1010
    %v1074 = vpop.xlane.xlu0 %1073
    %1075 = vadd.xlane.f32.xlu0 %v1012
    %v1076 = vpop.xlane.xlu0 %1075
    %1077 = vadd.xlane.f32.xlu0 %v1014
    %v1078 = vpop.xlane.xlu0 %1077
    %1079 = vadd.xlane.f32.xlu0 %v1016
    %v1080 = vpop.xlane.xlu0 %1079
    %1081 = vadd.xlane.f32.xlu0 %v1018
    %v1082 = vpop.xlane.xlu0 %1081
    %1083 = vadd.xlane.f32.xlu0 %v1020
    %v1084 = vpop.xlane.xlu0 %1083
    %1085 = vadd.xlane.f32.xlu0 %v1022
    %v1086 = vpop.xlane.xlu0 %1085
    %1087 = vadd.xlane.f32.xlu0 %v1024
    %v1088 = vpop.xlane.xlu0 %1087
    %v1089 = vrcp.pop %v1026
    %v1090 = vrcp.pop %v1028
    %v1091 = vrcp.pop %v1030
    %v1092 = vrcp.pop %v1032
    %v1093 = vrcp.pop %v1034
    %v1094 = vrcp.pop %v1036
    %v1095 = vrcp.pop %v1038
    %v1096 = vrcp.pop %v1040
    %v1097 = vrcp.pop %v1042
    %v1098 = vrcp.pop %v1044
    %v1099 = vrcp.pop %v1046
    %v1100 = vrcp.pop %v1048
    %v1101 = vrcp.pop %v1050
    %v1102 = vrcp.pop %v1052
    %v1103 = vrcp.pop %v1054
    %v1104 = vrcp.pop %v1056
    %v1105 = vrcp.pop %v1058
    %v1106 = vrcp.pop %v1060
    %v1107 = vrcp.pop %v1062
    %v1108 = vrcp.pop %v1064
    %v1109 = vrcp.pop %v1066
    %v1110 = vrcp.pop %v1068
    %v1111 = vrcp.pop %v1070
    %v1112 = vrcp.pop %v1072
    %v1113 = vrcp.pop %v1074
    %v1114 = vrcp.pop %v1076
    %v1115 = vrcp.pop %v1078
    %v1116 = vrcp.pop %v1080
    %v1117 = vrcp.pop %v1082
    %v1118 = vrcp.pop %v1084
    %v1119 = vrcp.pop %v1086
    %v1120 = vrcp.pop %v1088
    %v1121 = vmul.f32 %v962, %v1089
    %v1122 = vmul.f32 %v964, %v1090
    %v1123 = vmul.f32 %v966, %v1091
    %v1124 = vmul.f32 %v968, %v1092
    %v1125 = vmul.f32 %v970, %v1093
    %v1126 = vmul.f32 %v972, %v1094
    %v1127 = vmul.f32 %v974, %v1095
    %v1128 = vmul.f32 %v976, %v1096
    %v1129 = vmul.f32 %v978, %v1097
    %v1130 = vmul.f32 %v980, %v1098
    %v1131 = vmul.f32 %v982, %v1099
    %v1132 = vmul.f32 %v984, %v1100
    %v1133 = vmul.f32 %v986, %v1101
    %v1134 = vmul.f32 %v988, %v1102
    %v1135 = vmul.f32 %v990, %v1103
    %v1136 = vmul.f32 %v992, %v1104
    %v1137 = vmul.f32 %v994, %v1105
    %v1138 = vmul.f32 %v996, %v1106
    %v1139 = vmul.f32 %v998, %v1107
    %v1140 = vmul.f32 %v1000, %v1108
    %v1141 = vmul.f32 %v1002, %v1109
    %v1142 = vmul.f32 %v1004, %v1110
    %v1143 = vmul.f32 %v1006, %v1111
    %v1144 = vmul.f32 %v1008, %v1112
    %v1145 = vmul.f32 %v1010, %v1113
    %v1146 = vmul.f32 %v1012, %v1114
    %v1147 = vmul.f32 %v1014, %v1115
    %v1148 = vmul.f32 %v1016, %v1116
    %v1149 = vmul.f32 %v1018, %v1117
    %v1150 = vmul.f32 %v1020, %v1118
    %v1151 = vmul.f32 %v1022, %v1119
    %v1152 = vmul.f32 %v1024, %v1120
    %v1153 = vpack.c.bf16 %v1122, %v1121
    %v1154 = vpack.c.bf16 %v1124, %v1123
    %v1155 = vpack.c.bf16 %v1126, %v1125
    %v1156 = vpack.c.bf16 %v1128, %v1127
    %v1157 = vpack.c.bf16 %v1130, %v1129
    %v1158 = vpack.c.bf16 %v1132, %v1131
    %v1159 = vpack.c.bf16 %v1134, %v1133
    %v1160 = vpack.c.bf16 %v1136, %v1135
    %v1161 = vpack.c.bf16 %v1138, %v1137
    %v1162 = vpack.c.bf16 %v1140, %v1139
    %v1163 = vpack.c.bf16 %v1142, %v1141
    %v1164 = vpack.c.bf16 %v1144, %v1143
    %v1165 = vpack.c.bf16 %v1146, %v1145
    %v1166 = vpack.c.bf16 %v1148, %v1147
    %v1167 = vpack.c.bf16 %v1150, %v1149
    %v1168 = vpack.c.bf16 %v1152, %v1151
    %1169 = vmatprep.subr.bf16.mxu0 0
    %1170 = vmatpush1.bf16.msra.mxu0 %v646
    %1171 = vmatprep.subr.bf16.mxu0 0
    %1172 = vmatpush1.bf16.msra.mxu0 %v643
    %1173 = vmatprep.subr.bf16.mxu0 0
    %1174 = vmatpush1.bf16.msra.mxu0 %v640
    %1175 = vmatprep.subr.bf16.mxu0 0
    %1176 = vmatpush1.bf16.msra.mxu0 %v637
    %1177 = vmatprep.subr.bf16.mxu0 0
    %1178 = vmatpush1.bf16.msra.mxu0 %v634
    %1179 = vmatprep.subr.bf16.mxu0 0
    %1180 = vmatpush1.bf16.msra.mxu0 %v631
    %1181 = vmatprep.subr.bf16.mxu0 0
    %1182 = vmatpush1.bf16.msra.mxu0 %v628
    %1183 = vmatprep.subr.bf16.mxu0 0
    %1184 = vmatpush1.bf16.msra.mxu0 %v625
    %1185 = vmatprep.subr.bf16.mxu0 0
    %1186 = vmatpush2.bf16.msra.mxu0 0
    %1187 = vmatprep.subr.bf16.mxu0 0
    %1188 = vmatpush2.bf16.msra.mxu0 0
    %1189 = vmatprep.subr.bf16.mxu0 0
    %1190 = vmatpush2.bf16.msra.mxu0 0
    %1191 = vmatprep.subr.bf16.mxu0 0
    %1192 = vmatpush2.bf16.msra.mxu0 0
    %1193 = vmatprep.subr.bf16.mxu0 0
    %1194 = vmatpush2.bf16.msra.mxu0 0
    %1195 = vmatprep.subr.bf16.mxu0 0
    %1196 = vmatpush2.bf16.msra.mxu0 0
    %1197 = vmatprep.subr.bf16.mxu0 0
    %1198 = vmatpush2.bf16.msra.mxu0 0
    %1199 = vmatprep.subr.bf16.mxu0 0
    %1200 = vmatpush2.bf16.msra.mxu0 0
    %1201 = vmatprep.mubr.bf16.mxu0 0
    %1202 = vmatmul.mubr.bf16.gmra.mxu0 %v1153
    %v1203 = vpop.f32.mrf.mxu0
    %v1204 = vadd.f32 0.0, %v1203
    %v1205 = vpop.f32.mrf.mxu0
    %v1206 = vpop.f32.mrf.mxu0
    %v1207 = vadd.f32 0.0, %v1206
    %v1208 = vpop.f32.mrf.mxu0
    %1209 = vmatprep.mubr.bf16.mxu0 0
    %1210 = vmatmul.mubr.bf16.gmra.mxu0 %v1154
    %v1211 = vpop.f32.mrf.mxu0
    %v1212 = vadd.f32 0.0, %v1211
    %v1213 = vpop.f32.mrf.mxu0
    %v1214 = vpop.f32.mrf.mxu0
    %v1215 = vadd.f32 0.0, %v1214
    %v1216 = vpop.f32.mrf.mxu0
    %1217 = vmatprep.mubr.bf16.mxu0 0
    %1218 = vmatmul.mubr.bf16.gmra.mxu0 %v1155
    %v1219 = vpop.f32.mrf.mxu0
    %v1220 = vadd.f32 0.0, %v1219
    %v1221 = vpop.f32.mrf.mxu0
    %v1222 = vpop.f32.mrf.mxu0
    %v1223 = vadd.f32 0.0, %v1222
    %v1224 = vpop.f32.mrf.mxu0
    %1225 = vmatprep.mubr.bf16.mxu0 0
    %1226 = vmatmul.mubr.bf16.gmra.mxu0 %v1156
    %v1227 = vpop.f32.mrf.mxu0
    %v1228 = vadd.f32 0.0, %v1227
    %v1229 = vpop.f32.mrf.mxu0
    %v1230 = vpop.f32.mrf.mxu0
    %v1231 = vadd.f32 0.0, %v1230
    %v1232 = vpop.f32.mrf.mxu0
    %1233 = vmatprep.mubr.bf16.mxu0 0
    %1234 = vmatmul.mubr.bf16.gmra.mxu0 %v1157
    %v1235 = vpop.f32.mrf.mxu0
    %v1236 = vadd.f32 0.0, %v1235
    %v1237 = vpop.f32.mrf.mxu0
    %v1238 = vpop.f32.mrf.mxu0
    %v1239 = vadd.f32 0.0, %v1238
    %v1240 = vpop.f32.mrf.mxu0
    %1241 = vmatprep.mubr.bf16.mxu0 0
    %1242 = vmatmul.mubr.bf16.gmra.mxu0 %v1158
    %v1243 = vpop.f32.mrf.mxu0
    %v1244 = vadd.f32 0.0, %v1243
    %v1245 = vpop.f32.mrf.mxu0
    %v1246 = vpop.f32.mrf.mxu0
    %v1247 = vadd.f32 0.0, %v1246
    %v1248 = vpop.f32.mrf.mxu0
    %1249 = vmatprep.mubr.bf16.mxu0 0
    %1250 = vmatmul.mubr.bf16.gmra.mxu0 %v1159
    %v1251 = vpop.f32.mrf.mxu0
    %v1252 = vadd.f32 0.0, %v1251
    %v1253 = vpop.f32.mrf.mxu0
    %v1254 = vpop.f32.mrf.mxu0
    %v1255 = vadd.f32 0.0, %v1254
    %v1256 = vpop.f32.mrf.mxu0
    %1257 = vmatprep.mubr.bf16.mxu0 0
    %1258 = vmatmul.mubr.bf16.gmra.mxu0 %v1160
    %v1259 = vpop.f32.mrf.mxu0
    %v1260 = vadd.f32 0.0, %v1259
    %v1261 = vpop.f32.mrf.mxu0
    %v1262 = vpop.f32.mrf.mxu0
    %v1263 = vadd.f32 0.0, %v1262
    %v1264 = vpop.f32.mrf.mxu0
    %1265 = vdwg.mxu0
    %1266 = vmatprep.subr.bf16.mxu0 0
    %1267 = vmatpush1.bf16.msra.mxu0 %v670
    %1268 = vmatprep.subr.bf16.mxu0 0
    %1269 = vmatpush1.bf16.msra.mxu0 %v667
    %1270 = vmatprep.subr.bf16.mxu0 0
    %1271 = vmatpush1.bf16.msra.mxu0 %v664
    %1272 = vmatprep.subr.bf16.mxu0 0
    %1273 = vmatpush1.bf16.msra.mxu0 %v661
    %1274 = vmatprep.subr.bf16.mxu0 0
    %1275 = vmatpush1.bf16.msra.mxu0 %v658
    %1276 = vmatprep.subr.bf16.mxu0 0
    %1277 = vmatpush1.bf16.msra.mxu0 %v655
    %1278 = vmatprep.subr.bf16.mxu0 0
    %1279 = vmatpush1.bf16.msra.mxu0 %v652
    %1280 = vmatprep.subr.bf16.mxu0 0
    %1281 = vmatpush1.bf16.msra.mxu0 %v649
    %1282 = vmatprep.subr.bf16.mxu0 0
    %1283 = vmatpush2.bf16.msra.mxu0 0
    %1284 = vmatprep.subr.bf16.mxu0 0
    %1285 = vmatpush2.bf16.msra.mxu0 0
    %1286 = vmatprep.subr.bf16.mxu0 0
    %1287 = vmatpush2.bf16.msra.mxu0 0
    %1288 = vmatprep.subr.bf16.mxu0 0
    %1289 = vmatpush2.bf16.msra.mxu0 0
    %1290 = vmatprep.subr.bf16.mxu0 0
    %1291 = vmatpush2.bf16.msra.mxu0 0
    %1292 = vmatprep.subr.bf16.mxu0 0
    %1293 = vmatpush2.bf16.msra.mxu0 0
    %1294 = vmatprep.subr.bf16.mxu0 0
    %1295 = vmatpush2.bf16.msra.mxu0 0
    %1296 = vmatprep.subr.bf16.mxu0 0
    %1297 = vmatpush2.bf16.msra.mxu0 0
    %1298 = vmatprep.mubr.bf16.mxu0 0
    %1299 = vmatmul.mubr.bf16.gmra.mxu0 %v1161
    %v1300 = vpop.f32.mrf.mxu0
    %v1301 = vadd.f32 0.0, %v1300
    %v1302 = vpop.f32.mrf.mxu0
    %v1303 = vpop.f32.mrf.mxu0
    %v1304 = vadd.f32 0.0, %v1303
    %v1305 = vpop.f32.mrf.mxu0
    %1306 = vmatprep.mubr.bf16.mxu0 0
    %1307 = vmatmul.mubr.bf16.gmra.mxu0 %v1162
    %v1308 = vpop.f32.mrf.mxu0
    %v1309 = vadd.f32 0.0, %v1308
    %v1310 = vpop.f32.mrf.mxu0
    %v1311 = vpop.f32.mrf.mxu0
    %v1312 = vadd.f32 0.0, %v1311
    %v1313 = vpop.f32.mrf.mxu0
    %1314 = vmatprep.mubr.bf16.mxu0 0
    %1315 = vmatmul.mubr.bf16.gmra.mxu0 %v1163
    %v1316 = vpop.f32.mrf.mxu0
    %v1317 = vadd.f32 0.0, %v1316
    %v1318 = vpop.f32.mrf.mxu0
    %v1319 = vpop.f32.mrf.mxu0
    %v1320 = vadd.f32 0.0, %v1319
    %v1321 = vpop.f32.mrf.mxu0
    %1322 = vmatprep.mubr.bf16.mxu0 0
    %1323 = vmatmul.mubr.bf16.gmra.mxu0 %v1164
    %v1324 = vpop.f32.mrf.mxu0
    %v1325 = vadd.f32 0.0, %v1324
    %v1326 = vpop.f32.mrf.mxu0
    %v1327 = vpop.f32.mrf.mxu0
    %v1328 = vadd.f32 0.0, %v1327
    %v1329 = vpop.f32.mrf.mxu0
    %1330 = vmatprep.mubr.bf16.mxu0 0
    %1331 = vmatmul.mubr.bf16.gmra.mxu0 %v1165
    %v1332 = vpop.f32.mrf.mxu0
    %v1333 = vadd.f32 0.0, %v1332
    %v1334 = vpop.f32.mrf.mxu0
    %v1335 = vpop.f32.mrf.mxu0
    %v1336 = vadd.f32 0.0, %v1335
    %v1337 = vpop.f32.mrf.mxu0
    %1338 = vmatprep.mubr.bf16.mxu0 0
    %1339 = vmatmul.mubr.bf16.gmra.mxu0 %v1166
    %v1340 = vpop.f32.mrf.mxu0
    %v1341 = vadd.f32 0.0, %v1340
    %v1342 = vpop.f32.mrf.mxu0
    %v1343 = vpop.f32.mrf.mxu0
    %v1344 = vadd.f32 0.0, %v1343
    %v1345 = vpop.f32.mrf.mxu0
    %1346 = vmatprep.mubr.bf16.mxu0 0
    %1347 = vmatmul.mubr.bf16.gmra.mxu0 %v1167
    %v1348 = vpop.f32.mrf.mxu0
    %v1349 = vadd.f32 0.0, %v1348
    %v1350 = vpop.f32.mrf.mxu0
    %v1351 = vpop.f32.mrf.mxu0
    %v1352 = vadd.f32 0.0, %v1351
    %v1353 = vpop.f32.mrf.mxu0
    %1354 = vmatprep.mubr.bf16.mxu0 0
    %1355 = vmatmul.mubr.bf16.gmra.mxu0 %v1168
    %v1356 = vpop.f32.mrf.mxu0
    %v1357 = vadd.f32 0.0, %v1356
    %v1358 = vpop.f32.mrf.mxu0
    %v1359 = vpop.f32.mrf.mxu0
    %v1360 = vadd.f32 0.0, %v1359
    %v1361 = vpop.f32.mrf.mxu0
    %1362 = vdwg.mxu0
    %1363 = vst [vmem:[#allocation7] sm:$0xff] %v1204
    %1364 = vst [vmem:[#allocation7 + $0x8] sm:$0xff] %v1207
    %1365 = vst [vmem:[#allocation7 + $0x10] sm:$0xff] %v1212
    %1366 = vst [vmem:[#allocation7 + $0x18] sm:$0xff] %v1215
    %1367 = vst [vmem:[#allocation7 + $0x20] sm:$0xff] %v1220
    %1368 = vst [vmem:[#allocation7 + $0x28] sm:$0xff] %v1223
    %1369 = vst [vmem:[#allocation7 + $0x30] sm:$0xff] %v1228
    %1370 = vst [vmem:[#allocation7 + $0x38] sm:$0xff] %v1231
    %1371 = vst [vmem:[#allocation7 + $0x40] sm:$0xff] %v1236
    %1372 = vst [vmem:[#allocation7 + $0x48] sm:$0xff] %v1239
    %1373 = vst [vmem:[#allocation7 + $0x50] sm:$0xff] %v1244
    %1374 = vst [vmem:[#allocation7 + $0x58] sm:$0xff] %v1247
    %1375 = vst [vmem:[#allocation7 + $0x60] sm:$0xff] %v1252
    %1376 = vst [vmem:[#allocation7 + $0x68] sm:$0xff] %v1255
    %1377 = vst [vmem:[#allocation7 + $0x70] sm:$0xff] %v1260
    %1378 = vst [vmem:[#allocation7 + $0x78] sm:$0xff] %v1263
    %1379 = vst [vmem:[#allocation7 + $0x80] sm:$0xff] %v1301
    %1380 = vst [vmem:[#allocation7 + $0x88] sm:$0xff] %v1304
    %1381 = vst [vmem:[#allocation7 + $0x90] sm:$0xff] %v1309
    %1382 = vst [vmem:[#allocation7 + $0x98] sm:$0xff] %v1312
    %1383 = vst [vmem:[#allocation7 + $0xa0] sm:$0xff] %v1317
    %1384 = vst [vmem:[#allocation7 + $0xa8] sm:$0xff] %v1320
    %1385 = vst [vmem:[#allocation7 + $0xb0] sm:$0xff] %v1325
    %1386 = vst [vmem:[#allocation7 + $0xb8] sm:$0xff] %v1328
    %1387 = vst [vmem:[#allocation7 + $0xc0] sm:$0xff] %v1333
    %1388 = vst [vmem:[#allocation7 + $0xc8] sm:$0xff] %v1336
    %1389 = vst [vmem:[#allocation7 + $0xd0] sm:$0xff] %v1341
    %1390 = vst [vmem:[#allocation7 + $0xd8] sm:$0xff] %v1344
    %1391 = vst [vmem:[#allocation7 + $0xe0] sm:$0xff] %v1349
    %1392 = vst [vmem:[#allocation7 + $0xe8] sm:$0xff] %v1352
    %1393 = vst [vmem:[#allocation7 + $0xf0] sm:$0xff] %v1357
    %1394 = vst [vmem:[#allocation7 + $0xf8] sm:$0xff] %v1360
    // Predicated region
    $region22: #{tpu_custom_call.1} parent=1 // pred_check
      _
    $region23: #{tpu_custom_call.1} parent=1 // pred_check_branch
      %1396 = sbr.rel (0) target = $region25
    $region24: #{tpu_custom_call.1} parent=1 // pred_region
      %s1398 = ssub.s32 4096, 4096
      %1399 = vsyncadd [#allocation4], %s1398
      %s1400 = sshll.u32 [#allocation7], 4
      %s1401 = int_to_ptr.vmem [resolvable:$true] %s1400
      %1406 = dma.vmem_to_hbm [thread:$0]  %s1401, 4096, %s3, [#allocation4], 128, 128, 8
    $region25: #{tpu_custom_call.1} parent=1 // pred_fallthru
      _
    // Predicated region
    $region26: #{tpu_custom_call.1} parent=1 // pred_check
      _
    $region27: #{tpu_custom_call.1} parent=1 // pred_check_branch
      %1408 = sbr.rel (0) target = $region29
    $region28: #{tpu_custom_call.1} parent=1 // pred_region
      %1409 = dma.done [#allocation4], 4096
    $region29: #{tpu_custom_call.1} parent=1 // pred_fallthru
      _
    %1410 = vsyncpa [#allocation3], 1
    %1411 = vsyncpa [#allocation6], 1
    %1412 = vsyncpa [#allocation4], 1

</llo_original>
